<compile_context>
chip_gen: v5e
topology: v5e:2x2
jax: 0.10.0
libtpu: 0.0.40
codegen_flags: <defaults>
</compile_context>

<pallas_src>
import jax
import jax.numpy as jnp
from jax.experimental import pallas as pl
from jax.experimental.pallas import tpu as pltpu


# ----------------------------------------------------------------------------
# helpers
# ----------------------------------------------------------------------------
def _round_up(x, m):
    return ((x + m - 1) // m) * m


def _pick_tile(hw, batch, max_tile=4096):
    """Lane-tile size and tile count.

    n = cdiv(hw, max_tile); tn = round_up(cdiv(hw, n), 128) -> never pads the
    spatial extent up to a whole max_tile.  Also guarantees >= 2 total grid
    steps when batch == 1 (two-TensorCore chips).  hw <= 128 uses a full-dim
    block (allowed because block dim == array dim).
    """
    if hw <= 128:
        return hw, 1
    n = pl.cdiv(hw, max_tile)
    if batch * n < 2:
        n = min(2, pl.cdiv(hw, 128))
    tn = _round_up(pl.cdiv(hw, n), 128)
    return tn, pl.cdiv(hw, tn)


def _const_spec(shape):
    # resident (fully replicated) operand: weights / biases
    return pl.BlockSpec(shape, lambda b, i, _n=len(shape): (0,) * _n)


# ----------------------------------------------------------------------------
# Pallas kernel builder (lane-dense: channels on sublanes, H*W on lanes)
# ----------------------------------------------------------------------------
def _first_layer(w_ref, b_ref, x):
    """relu(W @ x + b); tiny-K (<=8) contraction as unrolled VPU FMA."""
    w = w_ref[...]
    b = b_ref[...]
    cin = x.shape[0]
    if cin <= 8:
        h = b + w[:, 0:1] * x[0:1, :]
        for c in range(1, cin):
            h = h + w[:, c:c + 1] * x[c:c + 1, :]
    else:
        h = jnp.dot(w, x, preferred_element_type=jnp.float32) + b
    return jnp.maximum(h, 0.0)


def _make_group_kernel(affinities, has_acc, has_dec, hidden):
    """Fused kernel for all pyramid levels sharing a spatial size.

    Ref order: [acc?] + per level [x, q?] + [mask?] + per level weights
    (w1,b1[,wq1,bq1],w2|w2bd,b2|b2bd) + [dec weights] + out.
    """

    def kernel(*refs):
        it = iter(refs)
        acc_ref = next(it) if has_acc else None
        xq_refs = []
        for aff in affinities:
            x_ref = next(it)
            q_ref = next(it) if aff else None
            xq_refs.append((x_ref, q_ref))
        m_ref = next(it) if has_dec else None
        lvl_w = [tuple(next(it) for _ in range(6 if aff else 4))
                 for aff in affinities]
        dec_w = tuple(next(it) for _ in range(5)) if has_dec else None
        o_ref = next(it)

        f32 = jnp.float32
        acc = acc_ref[...].astype(f32) if has_acc else None

        for (x_ref, q_ref), aff, ws in zip(xq_refs, affinities, lvl_w):
            x = x_ref[...].astype(f32)
            if aff:
                w1, b1, wq1, bq1, w2bd, b2bd = ws
                h = _first_layer(w1, b1, x)                       # (hid, tn)
                g = _first_layer(wq1, bq1, q_ref[...].astype(f32))
                hg = jnp.concatenate([h, g], axis=0)              # (2*hid, tn)
                # single block-diagonal MXU push covers feat + gate branches
                y = jnp.dot(w2bd[...], hg,
                            preferred_element_type=f32) + b2bd[...]
                feat = jnp.maximum(y[:hidden], 0.0) * jax.nn.sigmoid(y[hidden:])
            else:
                w1, b1, w2, b2 = ws
                h = _first_layer(w1, b1, x)
                feat = jnp.maximum(
                    jnp.dot(w2[...], h, preferred_element_type=f32) + b2[...],
                    0.0)
            acc = feat if acc is None else acc + feat             # in-kernel sum

        if has_dec:
            wf, wm, bd1, wd2, bd2 = dec_w
            m = m_ref[...].astype(f32)                            # (1, tn)
            h = jnp.dot(wf[...], acc, preferred_element_type=f32)
            h = jnp.maximum(h + wm[...] * m + bd1[...], 0.0)      # mask rank-1
            y = jnp.dot(wd2[...], h, preferred_element_type=f32) + bd2[...]
            o_ref[...] = y.astype(o_ref.dtype)                    # (2, tn)
        else:
            o_ref[...] = acc.astype(o_ref.dtype)                  # (hid, tn)

    return kernel


# ----------------------------------------------------------------------------
# pallas_call wrapper
# ----------------------------------------------------------------------------
def group_forward(xs, qs, acc, mask, lvl_params, dec_params, hidden,
                  out_dtype, max_tile=4096):
    """Fused forward for one spatial-size group.

    xs/qs: lists of (B, C, HW) / (B, Qd, HW) arrays (q entries may be None).
    acc:   optional (B, hidden, HW) running sum from coarser levels.
    mask:  optional (B, 1, HW); used only when dec_params is given.
    """
    batch, _, hw = xs[0].shape
    tn, ntiles = _pick_tile(hw, batch, max_tile)
    affinities = tuple(q is not None for q in qs)
    has_acc = acc is not None
    has_dec = dec_params is not None

    def dspec(c):
        return pl.BlockSpec((None, c, tn), lambda bb, i: (bb, 0, i))

    inputs, in_specs = [], []
    if has_acc:
        inputs.append(acc)
        in_specs.append(dspec(hidden))
    for x, q in zip(xs, qs):
        inputs.append(x)
        in_specs.append(dspec(x.shape[1]))
        if q is not None:
            inputs.append(q)
            in_specs.append(dspec(q.shape[1]))
    if has_dec:
        inputs.append(mask)
        in_specs.append(dspec(1))
    for ws in lvl_params:
        for w in ws:
            inputs.append(w)
            in_specs.append(_const_spec(w.shape))
    if has_dec:
        for w in dec_params:
            inputs.append(w)
            in_specs.append(_const_spec(w.shape))

    nout = dec_params[3].shape[0] if has_dec else hidden
    return pl.pallas_call(
        _make_group_kernel(affinities, has_acc, has_dec, hidden),
        out_shape=jax.ShapeDtypeStruct((batch, nout, hw), out_dtype),
        grid=(batch, ntiles),
        in_specs=in_specs,
        out_specs=pl.BlockSpec((None, nout, tn), lambda bb, i: (bb, 0, i)),
        compiler_params=pltpu.CompilerParams(
            dimension_semantics=("parallel", "parallel")),
    )(*inputs)


# ----------------------------------------------------------------------------
# ASSNLearner wrapper (parameter setup + resize glue in plain JAX)
# ----------------------------------------------------------------------------
class ASSNLearnerPallas:
    def __init__(self, benchmark, inch, qdim=16, hidden=32,
                 act_dtype=jnp.bfloat16, max_tile=4096, key=None):
        # mirrors the benchmark -> feature_affinity selection in __init__
        if benchmark == "pascal":
            self.feature_affinity = (False, True, True)
        elif benchmark == "coco":
            self.feature_affinity = (False, False, True)
        elif benchmark == "fss":
            self.feature_affinity = (True, True, True)
        else:
            raise ValueError(benchmark)

        self.inch = tuple(inch)
        self.hidden = hidden
        self.qdim = qdim
        self.act_dtype = act_dtype          # HBM storage dtype of intermediates
        self.max_tile = max_tile
        key = jax.random.PRNGKey(0) if key is None else key

        def lin_t(key, cin, cout, scale=0.1):
            # weights stored pre-transposed (cout, cin) for the lane-dense
            # (C, H*W) matmul layout; biases stored (cout, 1).
            k1, k2 = jax.random.split(key)
            w = scale * jax.random.normal(k1, (cout, cin), jnp.float32)
            b = scale * jax.random.normal(k2, (cout, 1), jnp.float32)
            return w, b

        self.params = {}
        keys = jax.random.split(key, 4 * len(self.inch) + 2)
        ki = 0
        for lvl, c in enumerate(self.inch):
            w1, b1 = lin_t(keys[ki], c, hidden); ki += 1
            w2, b2 = lin_t(keys[ki], hidden, hidden); ki += 1
            if self.feature_affinity[lvl]:
                wq1, bq1 = lin_t(keys[ki], qdim, hidden); ki += 1
                wq2, bq2 = lin_t(keys[ki], hidden, hidden); ki += 1
                # block-diagonal second layer: one (2*hid, 2*hid) MXU push
                # covers both the corr-feature and affinity-gate branches.
                w2bd = jnp.zeros((2 * hidden, 2 * hidden), jnp.float32)
                w2bd = w2bd.at[:hidden, :hidden].set(w2)
                w2bd = w2bd.at[hidden:, hidden:].set(wq2)
                b2bd = jnp.concatenate([b2, bq2], axis=0)
                self.params[f"lvl{lvl}"] = (w1, b1, wq1, bq1, w2bd, b2bd)
            else:
                self.params[f"lvl{lvl}"] = (w1, b1, w2, b2)
        wd1, bd1 = lin_t(keys[-2], hidden + 1, hidden)   # (hid, hid+1)
        wd2, bd2 = lin_t(keys[-1], hidden, 2)            # (2, hid)
        # support-mask channel folded into the decoder as a rank-1 update.
        self.params["dec"] = (wd1[:, :hidden], wd1[:, hidden:hidden + 1],
                              bd1, wd2, bd2)

    def __call__(self, hypercorr_pyramid, query_feats, support_mask,
                 corr_transformer=None):
        # TODO(synk): corr_transformer internals are not in the reference;
        # accepted for signature parity and ignored.
        batch = hypercorr_pyramid[0].shape[0]
        sizes = [tuple(c.shape[2:]) for c in hypercorr_pyramid]
        tgt_h, tgt_w = max(sizes, key=lambda s: s[0] * s[1])

        groups = {}
        for lvl, sz in enumerate(sizes):
            groups.setdefault(sz, []).append(lvl)

        def level_inputs(lvl):
            corr = hypercorr_pyramid[lvl]
            b, cin, h, w = corr.shape
            x = corr.reshape(b, cin, h * w)              # channel-first, free
            q = None
            if self.feature_affinity[lvl]:
                qf = query_feats[lvl]
                if qf.shape[1] != self.qdim:
                    raise ValueError(
                        f"query_feats[{lvl}] has {qf.shape[1]} channels, "
                        f"expected qdim={self.qdim}")
                q = qf.reshape(b, self.qdim, h * w)
            return x, q

        # Coarser spatial sizes: one fused call per size (levels summed
        # in-kernel), feat stored bf16, then XLA bilinear resize + accumulate.
        coarse = None
        for sz, lvls in groups.items():
            if sz == (tgt_h, tgt_w):
                continue
            h, w = sz
            xs, qs = zip(*(level_inputs(l) for l in lvls))
            feat = group_forward(list(xs), list(qs), None, None,
                                 [self.params[f"lvl{l}"] for l in lvls], None,
                                 self.hidden, self.act_dtype, self.max_tile)
            feat = feat.reshape(batch, self.hidden, h, w)
            feat = jax.image.resize(
                feat, (batch, self.hidden, tgt_h, tgt_w),
                method="bilinear").astype(self.act_dtype)
            coarse = feat if coarse is None else coarse + feat

        # Finest spatial size: level squeeze + affinity gating + multi-level
        # sum + coarse accumulator + mask-conditioned decoder, all in ONE call.
        hw = tgt_h * tgt_w
        lvls = groups[(tgt_h, tgt_w)]
        xs, qs = zip(*(level_inputs(l) for l in lvls))
        acc = None if coarse is None else coarse.reshape(batch, self.hidden, hw)
        mask = jax.image.resize(support_mask.astype(jnp.float32),
                                (batch, tgt_h, tgt_w), method="bilinear")
        mask = mask.reshape(batch, 1, hw)
        logits = group_forward(list(xs), list(qs), acc, mask,
                               [self.params[f"lvl{l}"] for l in lvls],
                               self.params["dec"], self.hidden, jnp.float32,
                               self.max_tile)
        return logits.reshape(batch, 2, tgt_h, tgt_w)    # NCHW (B, 2, H, W)


# ----------------------------------------------------------------------------
# Demo
# ----------------------------------------------------------------------------
if __name__ == "__main__":
    key = jax.random.PRNGKey(0)
    k = jax.random.split(key, 8)

    B, QDIM, HIDDEN = 2, 16, 32
    INCH = (4, 6, 3)  # correlation channels per pyramid level

    # hypercorrelation pyramid, NCHW (coarse -> fine)
    hypercorr_pyramid = [
        jax.random.normal(k[0], (B, INCH[0], 8, 8), jnp.float32),
        jax.random.normal(k[1], (B, INCH[1], 16, 16), jnp.float32),
        jax.random.normal(k[2], (B, INCH[2], 16, 16), jnp.float32),
    ]
    # query features per level, NCHW
    query_feats = [
        jax.random.normal(k[3], (B, QDIM, 8, 8), jnp.float32),
        jax.random.normal(k[4], (B, QDIM, 16, 16), jnp.float32),
        jax.random.normal(k[5], (B, QDIM, 16, 16), jnp.float32),
    ]
    # support mask, (B, H, W)
    support_mask = (jax.random.uniform(k[6], (B, 32, 32)) > 0.5).astype(jnp.float32)

    learner = ASSNLearnerPallas(benchmark="pascal", inch=INCH,
                                qdim=QDIM, hidden=HIDDEN, key=k[7])

    logits = learner(hypercorr_pyramid, query_feats, support_mask,
                     corr_transformer=None)
    jax.block_until_ready(logits)
    assert logits.shape == (B, 2, 16, 16), logits.shape
    print("KERNEL_OK")
</pallas_src>

<mosaic_0001>
module attributes {stable_mosaic.version = 11 : i64} {
  func.func @kernel(%arg0: i32, %arg1: i32, %arg2: memref<1x4x64xf32, #tpu.memory_space<vmem>>, %arg3: memref<32x4xf32, #tpu.memory_space<vmem>>, %arg4: memref<32x1xf32, #tpu.memory_space<vmem>>, %arg5: memref<32x32xf32, #tpu.memory_space<vmem>>, %arg6: memref<32x1xf32, #tpu.memory_space<vmem>>, %arg7: memref<1x32x64xbf16, #tpu.memory_space<vmem>>) attributes {dimension_semantics = [#tpu.dimension_semantics<parallel>, #tpu.dimension_semantics<parallel>], iteration_bounds = array<i64: 2, 1>, scalar_prefetch = 0 : i64, scratch_operands = 0 : i64, tpu.core_type = #tpu.core_type<tc>, window_params = [{transform_indices = @transform_0, window_bounds = array<i64: 1, 4, 64>}, {pipeline_mode = #tpu.pipeline_mode<synchronous>, transform_indices = @transform_1, window_bounds = array<i64: 32, 4>}, {pipeline_mode = #tpu.pipeline_mode<synchronous>, transform_indices = @transform_2, window_bounds = array<i64: 32, 1>}, {pipeline_mode = #tpu.pipeline_mode<synchronous>, transform_indices = @transform_3, window_bounds = array<i64: 32, 32>}, {pipeline_mode = #tpu.pipeline_mode<synchronous>, transform_indices = @transform_4, window_bounds = array<i64: 32, 1>}, {transform_indices = @transform_5, window_bounds = array<i64: 1, 32, 64>}]} {
    %c0 = arith.constant 0 : index
    %c0_0 = arith.constant 0 : index
    %c0_1 = arith.constant 0 : index
    %0 = vector.load %arg2[%c0, %c0_0, %c0_1] : memref<1x4x64xf32, #tpu.memory_space<vmem>>, vector<1x4x64xf32>
    %1 = vector.shape_cast %0 : vector<1x4x64xf32> to vector<4x64xf32>
    %c0_2 = arith.constant 0 : index
    %c0_3 = arith.constant 0 : index
    %2 = vector.load %arg3[%c0_2, %c0_3] : memref<32x4xf32, #tpu.memory_space<vmem>>, vector<32x4xf32>
    %c0_4 = arith.constant 0 : index
    %c0_5 = arith.constant 0 : index
    %3 = vector.load %arg4[%c0_4, %c0_5] : memref<32x1xf32, #tpu.memory_space<vmem>>, vector<32x1xf32>
    %4 = vector.extract_strided_slice %2 {offsets = [0, 0], sizes = [32, 1], strides = [1, 1]} : vector<32x4xf32> to vector<32x1xf32>
    %5 = vector.extract_strided_slice %1 {offsets = [0, 0], sizes = [1, 64], strides = [1, 1]} : vector<4x64xf32> to vector<1x64xf32>
    %6 = vector.broadcast %4 : vector<32x1xf32> to vector<32x64xf32>
    %7 = vector.broadcast %5 : vector<1x64xf32> to vector<32x64xf32>
    %8 = arith.mulf %6, %7 : vector<32x64xf32>
    %9 = vector.broadcast %3 : vector<32x1xf32> to vector<32x64xf32>
    %10 = arith.addf %9, %8 : vector<32x64xf32>
    %11 = vector.extract_strided_slice %2 {offsets = [0, 1], sizes = [32, 1], strides = [1, 1]} : vector<32x4xf32> to vector<32x1xf32>
    %12 = vector.extract_strided_slice %1 {offsets = [1, 0], sizes = [1, 64], strides = [1, 1]} : vector<4x64xf32> to vector<1x64xf32>
    %13 = vector.broadcast %11 : vector<32x1xf32> to vector<32x64xf32>
    %14 = vector.broadcast %12 : vector<1x64xf32> to vector<32x64xf32>
    %15 = arith.mulf %13, %14 : vector<32x64xf32>
    %16 = arith.addf %10, %15 : vector<32x64xf32>
    %17 = vector.extract_strided_slice %2 {offsets = [0, 2], sizes = [32, 1], strides = [1, 1]} : vector<32x4xf32> to vector<32x1xf32>
    %18 = vector.extract_strided_slice %1 {offsets = [2, 0], sizes = [1, 64], strides = [1, 1]} : vector<4x64xf32> to vector<1x64xf32>
    %19 = vector.broadcast %17 : vector<32x1xf32> to vector<32x64xf32>
    %20 = vector.broadcast %18 : vector<1x64xf32> to vector<32x64xf32>
    %21 = arith.mulf %19, %20 : vector<32x64xf32>
    %22 = arith.addf %16, %21 : vector<32x64xf32>
    %23 = vector.extract_strided_slice %2 {offsets = [0, 3], sizes = [32, 1], strides = [1, 1]} : vector<32x4xf32> to vector<32x1xf32>
    %24 = vector.extract_strided_slice %1 {offsets = [3, 0], sizes = [1, 64], strides = [1, 1]} : vector<4x64xf32> to vector<1x64xf32>
    %25 = vector.broadcast %23 : vector<32x1xf32> to vector<32x64xf32>
    %26 = vector.broadcast %24 : vector<1x64xf32> to vector<32x64xf32>
    %27 = arith.mulf %25, %26 : vector<32x64xf32>
    %28 = arith.addf %22, %27 : vector<32x64xf32>
    %cst = arith.constant 0.000000e+00 : f32
    %29 = vector.broadcast %cst : f32 to vector<32x64xf32>
    %30 = arith.maximumf %28, %29 : vector<32x64xf32>
    %c0_6 = arith.constant 0 : index
    %c0_7 = arith.constant 0 : index
    %31 = vector.load %arg5[%c0_6, %c0_7] : memref<32x32xf32, #tpu.memory_space<vmem>>, vector<32x32xf32>
    %cst_8 = arith.constant dense<0.000000e+00> : vector<32x64xf32>
    %32 = tpu.matmul %31, %30, %cst_8 {dimension_numbers = #tpu.dot_dimension_numbers<[1], [0], [0], [1], [0, 0, 1, 1], [], []>} : vector<32x32xf32>, vector<32x64xf32>, vector<32x64xf32> -> vector<32x64xf32>
    %c0_9 = arith.constant 0 : index
    %c0_10 = arith.constant 0 : index
    %33 = vector.load %arg6[%c0_9, %c0_10] : memref<32x1xf32, #tpu.memory_space<vmem>>, vector<32x1xf32>
    %34 = vector.broadcast %33 : vector<32x1xf32> to vector<32x64xf32>
    %35 = arith.addf %32, %34 : vector<32x64xf32>
    %cst_11 = arith.constant 0.000000e+00 : f32
    %36 = vector.broadcast %cst_11 : f32 to vector<32x64xf32>
    %37 = arith.maximumf %35, %36 : vector<32x64xf32>
    %38 = arith.truncf %37 : vector<32x64xf32> to vector<32x64xbf16>
    %c0_12 = arith.constant 0 : index
    %c0_13 = arith.constant 0 : index
    %c0_14 = arith.constant 0 : index
    %39 = vector.load %arg7[%c0_12, %c0_13, %c0_14] : memref<1x32x64xbf16, #tpu.memory_space<vmem>>, vector<1x32x64xbf16>
    %40 = vector.shape_cast %39 : vector<1x32x64xbf16> to vector<32x64xbf16>
    %41 = vector.shape_cast %38 : vector<32x64xbf16> to vector<1x32x64xbf16>
    tpu.vector_store %arg7[%c0_12, %c0_13, %c0_14], %41 {strides = array<i32>} : memref<1x32x64xbf16, #tpu.memory_space<vmem>>, vector<1x32x64xbf16>,
    return
  }
  func.func @transform_0(%arg0: i32, %arg1: i32) -> (i32, i32, i32) {
    %c0_i32 = arith.constant 0 : i32
    %c0_i32_0 = arith.constant 0 : i32
    return %arg0, %c0_i32, %arg1 : i32, i32, i32
  }
  func.func @transform_1(%arg0: i32, %arg1: i32) -> (i32, i32) {
    %c0_i32 = arith.constant 0 : i32
    %c0_i32_0 = arith.constant 0 : i32
    %c0_i32_1 = arith.constant 0 : i32
    return %c0_i32, %c0_i32_0 : i32, i32
  }
  func.func @transform_2(%arg0: i32, %arg1: i32) -> (i32, i32) {
    %c0_i32 = arith.constant 0 : i32
    %c0_i32_0 = arith.constant 0 : i32
    %c0_i32_1 = arith.constant 0 : i32
    return %c0_i32, %c0_i32_0 : i32, i32
  }
  func.func @transform_3(%arg0: i32, %arg1: i32) -> (i32, i32) {
    %c0_i32 = arith.constant 0 : i32
    %c0_i32_0 = arith.constant 0 : i32
    %c0_i32_1 = arith.constant 0 : i32
    return %c0_i32, %c0_i32_0 : i32, i32
  }
  func.func @transform_4(%arg0: i32, %arg1: i32) -> (i32, i32) {
    %c0_i32 = arith.constant 0 : i32
    %c0_i32_0 = arith.constant 0 : i32
    %c0_i32_1 = arith.constant 0 : i32
    return %c0_i32, %c0_i32_0 : i32, i32
  }
  func.func @transform_5(%arg0: i32, %arg1: i32) -> (i32, i32, i32) {
    %c0_i32 = arith.constant 0 : i32
    %c0_i32_0 = arith.constant 0 : i32
    return %arg0, %c0_i32, %arg1 : i32, i32, i32
  }
}

</mosaic_0001>

<llo_original>
// kernel: tpu_custom_call.1
$region0: #{tpu_custom_call.1}
  #allocation0 [shape = 'u32[]', space=smem, size = 0x4, offset = 0x4, fixed_abs, tag = 'smem constant byte address 0x4 - core index']
  #allocation1 [shape = 'u32[72,128]{1,0:T(1,128)}', space=vmem, size = 0x9000, scoped, tag = 'internal scratch']
  %s0 = inlined_call_operand.vmem [shape: f32[2,4,64], index: 0, kind: input, shape index: {}]
  %s1 = inlined_call_operand.vmem [shape: f32[32,4], index: 1, kind: input, shape index: {}]
  %s2 = inlined_call_operand.vmem [shape: f32[32,1], index: 2, kind: input, shape index: {}]
  %s3 = inlined_call_operand.vmem [shape: f32[32,32], index: 3, kind: input, shape index: {}]
  %s4 = inlined_call_operand.vmem [shape: f32[32,1], index: 4, kind: input, shape index: {}]
  %s5 = inlined_call_operand.hbm [shape: bf16[2,32,64], index: 5, kind: output, shape index: {}]
  %s6 = sld [smem:[#allocation0]]
  $region53: #{tpu_custom_call.1} parent=0
    _
  %s8 = ssub.s32 1, %s6
  %s9 = scalar_select 0, %s8, %s6
  $region1: #{tpu_custom_call.1} parent=0
    #allocation2 [shape = 'u8[16384]{0}', space=vmem, size = 0x4000, scoped, tag = 'output window, operand 0']
    #allocation3 [shape = 's32[2]{0}', space=sflag, size = 0x8, scoped, tag = 'scoped memory for tpu_custom_call.1']
    %10 = vsyncpa [#allocation3], 0
    %s11 = scalar_lea.sflag [#allocation3], 1
    %12 = vsyncpa %s11, 0
    loop: start=0, step=1, limit=4
    $region2: #{tpu_custom_call.1} parent=1 // loop_pre_header
      _
    $region3: #{tpu_custom_call.1} parent=1 // loop_header
      %s14 = sphi 0, %s18
      %p15 = scmp.ge.s32.totalorder %s14, 4
      %s21 = sphi 0, %s33
      %s22 = sphi 0, %s29
      %s23 = sphi 0, %s21
      %s24 = sphi 0, %s22
      %s25 = sphi 0, %s23
      %s26 = sphi 0, %s24
      %s38 = sphi 0, %s40
      %s41 = sphi 0, %s38
      %s42 = sphi 0, %s41
      %s58 = sphi 0, %s42
      %s62 = sphi 0, %s62
      %s64 = sphi 0, %s62
      %s65 = sphi 0, %s64
      %s79 = sphi 0, %s65
      %s83 = sphi 0, %s83
      %s85 = sphi 0, %s83
      %s86 = sphi 0, %s85
      %s100 = sphi 0, %s86
      %s104 = sphi 0, %s104
      %s106 = sphi 0, %s104
      %s107 = sphi 0, %s106
      %s121 = sphi 0, %s107
      %s125 = sphi 0, %s125
      %s127 = sphi 0, %s125
      %s128 = sphi 0, %s127
      %s142 = sphi 0, %s128
      %s150 = sphi 0, %s152
      %s153 = sphi 0, %s150
      %s154 = sphi 0, %s153
      %s170 = sphi 0, %s154
    $region4: #{tpu_custom_call.1} parent=1 // loop_header_branch
      %17 = sbr.rel (%p15) target = $region8
    $region5: #{tpu_custom_call.1} parent=1 // loop_body
      %s19 = ssub.s32 %s14, 1
      %s20 = ssub.s32 %s14, 2
      %s27 = sadd.s32 1, %s22
      %p28 = scmp.ge.s32.totalorder %s27, 1
      %s29 = scalar_select %p28, 0, %s27
      %s30 = sadd.s32 1, %s21
      %s31 = scalar_select %p28, %s30, %s21
      %p32 = scmp.ge.s32.totalorder %s31, 2
      %s33 = scalar_select %p32, 0, %s31
      %s34 = ssub.s32 %s21, %s33
      %s35 = ssub.s32 %s22, %s29
      %s36 = sor.u32 %s34, %s35
      %p37 = scmp.eq.s32.totalorder %s36, 0
      %s39 = sadd.s32 %s38, 1
      %s40 = scalar_select %p37, %s38, %s39
      %p43 = pneg %p37
      %p44 = scmp.eq.s32.totalorder %s14, 1
      %p45 = por %p43, %p44
      %p46 = scmp.ne.s32.totalorder %s38, %s41
      %p47 = scmp.eq.s32.totalorder %s14, 0
      %p48 = por %p46, %p47
      %p49 = scmp.ne.s32.totalorder %s38, %s41
      %p50 = scmp.eq.s32.totalorder %s19, 1
      %p51 = por %p49, %p50
      %p52 = scmp.ne.s32.totalorder %s41, %s42
      %p53 = scmp.eq.s32.totalorder %s19, 0
      %p54 = por %p52, %p53
      %p55 = scmp.ne.s32.totalorder %s41, %s42
      %p56 = scmp.eq.s32.totalorder %s20, 1
      %p57 = por %p55, %p56
      %p59 = scmp.ne.s32.totalorder %s42, %s58
      %p60 = scmp.eq.s32.totalorder %s20, 0
      %p61 = por %p59, %p60
      %s63 = sadd.s32 %s62, 1
      %p66 = scmp.eq.s32.totalorder %s14, 1
      %p67 = scmp.ne.s32.totalorder %s62, %s64
      %p68 = scmp.eq.s32.totalorder %s14, 0
      %p69 = por %p67, %p68
      %p70 = scmp.ne.s32.totalorder %s62, %s64
      %p71 = scmp.eq.s32.totalorder %s19, 1
      %p72 = por %p70, %p71
      %p73 = scmp.ne.s32.totalorder %s64, %s65
      %p74 = scmp.eq.s32.totalorder %s19, 0
      %p75 = por %p73, %p74
      %p76 = scmp.ne.s32.totalorder %s64, %s65
      %p77 = scmp.eq.s32.totalorder %s20, 1
      %p78 = por %p76, %p77
      %p80 = scmp.ne.s32.totalorder %s65, %s79
      %p81 = scmp.eq.s32.totalorder %s20, 0
      %p82 = por %p80, %p81
      %s84 = sadd.s32 %s83, 1
      %p87 = scmp.eq.s32.totalorder %s14, 1
      %p88 = scmp.ne.s32.totalorder %s83, %s85
      %p89 = scmp.eq.s32.totalorder %s14, 0
      %p90 = por %p88, %p89
      %p91 = scmp.ne.s32.totalorder %s83, %s85
      %p92 = scmp.eq.s32.totalorder %s19, 1
      %p93 = por %p91, %p92
      %p94 = scmp.ne.s32.totalorder %s85, %s86
      %p95 = scmp.eq.s32.totalorder %s19, 0
      %p96 = por %p94, %p95
      %p97 = scmp.ne.s32.totalorder %s85, %s86
      %p98 = scmp.eq.s32.totalorder %s20, 1
      %p99 = por %p97, %p98
      %p101 = scmp.ne.s32.totalorder %s86, %s100
      %p102 = scmp.eq.s32.totalorder %s20, 0
      %p103 = por %p101, %p102
      %s105 = sadd.s32 %s104, 1
      %p108 = scmp.eq.s32.totalorder %s14, 1
      %p109 = scmp.ne.s32.totalorder %s104, %s106
      %p110 = scmp.eq.s32.totalorder %s14, 0
      %p111 = por %p109, %p110
      %p112 = scmp.ne.s32.totalorder %s104, %s106
      %p113 = scmp.eq.s32.totalorder %s19, 1
      %p114 = por %p112, %p113
      %p115 = scmp.ne.s32.totalorder %s106, %s107
      %p116 = scmp.eq.s32.totalorder %s19, 0
      %p117 = por %p115, %p116
      %p118 = scmp.ne.s32.totalorder %s106, %s107
      %p119 = scmp.eq.s32.totalorder %s20, 1
      %p120 = por %p118, %p119
      %p122 = scmp.ne.s32.totalorder %s107, %s121
      %p123 = scmp.eq.s32.totalorder %s20, 0
      %p124 = por %p122, %p123
      %s126 = sadd.s32 %s125, 1
      %p129 = scmp.eq.s32.totalorder %s14, 1
      %p130 = scmp.ne.s32.totalorder %s125, %s127
      %p131 = scmp.eq.s32.totalorder %s14, 0
      %p132 = por %p130, %p131
      %p133 = scmp.ne.s32.totalorder %s125, %s127
      %p134 = scmp.eq.s32.totalorder %s19, 1
      %p135 = por %p133, %p134
      %p136 = scmp.ne.s32.totalorder %s127, %s128
      %p137 = scmp.eq.s32.totalorder %s19, 0
      %p138 = por %p136, %p137
      %p139 = scmp.ne.s32.totalorder %s127, %s128
      %p140 = scmp.eq.s32.totalorder %s20, 1
      %p141 = por %p139, %p140
      %p143 = scmp.ne.s32.totalorder %s128, %s142
      %p144 = scmp.eq.s32.totalorder %s20, 0
      %p145 = por %p143, %p144
      %s146 = ssub.s32 %s21, %s33
      %s147 = ssub.s32 %s22, %s29
      %s148 = sor.u32 %s146, %s147
      %p149 = scmp.eq.s32.totalorder %s148, 0
      %s151 = sadd.s32 %s150, 1
      %s152 = scalar_select %p149, %s150, %s151
      %p155 = pneg %p149
      %p156 = scmp.eq.s32.totalorder %s14, 1
      %p157 = por %p155, %p156
      %p158 = scmp.ne.s32.totalorder %s150, %s153
      %p159 = scmp.eq.s32.totalorder %s14, 0
      %p160 = por %p158, %p159
      %p161 = scmp.ne.s32.totalorder %s150, %s153
      %p162 = scmp.eq.s32.totalorder %s19, 1
      %p163 = por %p161, %p162
      %p164 = scmp.ne.s32.totalorder %s153, %s154
      %p165 = scmp.eq.s32.totalorder %s19, 0
      %p166 = por %p164, %p165
      %p167 = scmp.ne.s32.totalorder %s153, %s154
      %p168 = scmp.eq.s32.totalorder %s20, 1
      %p169 = por %p167, %p168
      %p171 = scmp.ne.s32.totalorder %s154, %s170
      %p172 = scmp.eq.s32.totalorder %s20, 0
      %p173 = por %p171, %p172
      %p174 = scmp.le.s32.totalorder 1, %s14
      %p175 = scmp.lt.s32.totalorder %s14, 3
      %p176 = pnand %p174, %p175
      %p177 = pneg %p176
      // Predicated region
      $region9: #{tpu_custom_call.1} parent=5 // pred_check
        _
      $region10: #{tpu_custom_call.1} parent=5 // pred_check_branch
        %179 = sbr.rel (%p176) target = $region12
      $region11: #{tpu_custom_call.1} parent=5 // pred_region
        %s180 = ssub.s32 %s14, 1
        // Predicated region
        $region13: #{tpu_custom_call.1} parent=11 // pred_check
          %p181 = pneg %p75
        $region14: #{tpu_custom_call.1} parent=11 // pred_check_branch
          %183 = sbr.rel (%p181) target = $region16
        $region15: #{tpu_custom_call.1} parent=11 // pred_region
          _
        $region16: #{tpu_custom_call.1} parent=11 // pred_fallthru
          _
        // Predicated region
        $region17: #{tpu_custom_call.1} parent=11 // pred_check
          %p184 = pneg %p96
        $region18: #{tpu_custom_call.1} parent=11 // pred_check_branch
          %186 = sbr.rel (%p184) target = $region20
        $region19: #{tpu_custom_call.1} parent=11 // pred_region
          _
        $region20: #{tpu_custom_call.1} parent=11 // pred_fallthru
          _
        // Predicated region
        $region21: #{tpu_custom_call.1} parent=11 // pred_check
          %p187 = pneg %p117
        $region22: #{tpu_custom_call.1} parent=11 // pred_check_branch
          %189 = sbr.rel (%p187) target = $region24
        $region23: #{tpu_custom_call.1} parent=11 // pred_region
          _
        $region24: #{tpu_custom_call.1} parent=11 // pred_fallthru
          _
        // Predicated region
        $region25: #{tpu_custom_call.1} parent=11 // pred_check
          %p190 = pneg %p138
        $region26: #{tpu_custom_call.1} parent=11 // pred_check_branch
          %192 = sbr.rel (%p190) target = $region28
        $region27: #{tpu_custom_call.1} parent=11 // pred_region
          _
        $region28: #{tpu_custom_call.1} parent=11 // pred_fallthru
          _
      $region12: #{tpu_custom_call.1} parent=5 // pred_fallthru
        _
      %p193 = scmp.lt.s32.totalorder %s14, 2
      // Predicated region
      $region29: #{tpu_custom_call.1} parent=5 // pred_check
        %p194 = pneg %p193
      $region30: #{tpu_custom_call.1} parent=5 // pred_check_branch
        %196 = sbr.rel (%p194) target = $region32
      $region31: #{tpu_custom_call.1} parent=5 // pred_region
        // Predicated region
        $region33: #{tpu_custom_call.1} parent=31 // pred_check
          %p197 = pneg %p48
        $region34: #{tpu_custom_call.1} parent=31 // pred_check_branch
          %199 = sbr.rel (%p197) target = $region36
        $region35: #{tpu_custom_call.1} parent=31 // pred_region
          %p200 = scmp.lt.s32.totalorder %s21, 1
          %s201 = scalar_select %p200, %s21, 1
          %p202 = scmp.lt.s32.totalorder %s22, 0
          %s203 = scalar_select %p202, %s22, 0
          %s204 = sadd.s32 %s203, %s201
          %s205 = smul.addr %s204, 4
          %s206 = scalar_lea.vmem %s0, %s205
        $region36: #{tpu_custom_call.1} parent=31 // pred_fallthru
          _
      $region32: #{tpu_custom_call.1} parent=5 // pred_fallthru
        _
      %p207 = scmp.le.s32.totalorder 1, %s14
      %p208 = scmp.lt.s32.totalorder %s14, 3
      %p209 = pnand %p207, %p208
      %p210 = pneg %p209
      // Predicated region
      $region37: #{tpu_custom_call.1} parent=5 // pred_check
        _
      $region38: #{tpu_custom_call.1} parent=5 // pred_check_branch
        %212 = sbr.rel (%p209) target = $region40
      $region39: #{tpu_custom_call.1} parent=5 // pred_region
        %s213 = ssub.s32 %s14, 1
        %p214 = scmp.lt.s32.totalorder %s23, 1
        %s215 = scalar_select %p214, %s23, 1
        %p216 = scmp.lt.s32.totalorder %s24, 0
        %s217 = scalar_select %p216, %s24, 0
        %s218 = sadd.s32 %s217, %s215
        %s219 = smul.addr %s218, 4
        %s220 = scalar_lea.vmem %s0, %s219
        %p221 = pneg %p54
        %p222 = pneg %p51
        %p223 = pneg %p75
        %p224 = pneg %p72
        %p225 = pneg %p96
        %p226 = pneg %p93
        %p227 = pneg %p117
        %p228 = pneg %p114
        %p229 = pneg %p138
        %p230 = pneg %p135
        %p231 = pneg %p166
        %p232 = pneg %p163
        %s233 = sand.u32 %s153, 1
        %s234 = scalar_lea.sflag [#allocation3], %s233
        %s235 = sand.u32 %s153, 1
        %s236 = smul.addr %s235, 16
        %s237 = scalar_lea.vmem [#allocation2], %s236
        %p238 = scmp.lt.s32.totalorder %s23, 1
        %s239 = scalar_select %p238, %s23, 1
        %p240 = scmp.lt.s32.totalorder %s24, 0
        %s241 = scalar_select %p240, %s24, 0
        %s242 = sadd.s32 %s241, %s239
        %s243 = smul.addr %s242, 4
        %s244 = scalar_lea.vmem %s0, %s243
        %v245 = vld [vmem:[%s244] sm:$0xf]
        %v246 = vld [vmem:[%s1] sm:$0xff]
        %v247 = vld [vmem:[%s1 + $0x8] sm:$0xff]
        %v248 = vld [vmem:[%s1 + $0x10] sm:$0xff]
        %v249 = vld [vmem:[%s1 + $0x18] sm:$0xff]
        %v250 = vld [vmem:[%s2] sm:$0xff]
        %v251 = vld [vmem:[%s2 + $0x8] sm:$0xff]
        %v252 = vld [vmem:[%s2 + $0x10] sm:$0xff]
        %v253 = vld [vmem:[%s2 + $0x18] sm:$0xff]
        %255 = vset.pattern.permute.xlu0 0
        %256 = vperm.xlu0 %255, %v246
        %v257 = vpop.permute.xlu0 %256
        %260 = vset.pattern.permute.xlu0 0
        %261 = vperm.xlu0 %260, %v247
        %v262 = vpop.permute.xlu0 %261
        %265 = vset.pattern.permute.xlu0 0
        %266 = vperm.xlu0 %265, %v248
        %v267 = vpop.permute.xlu0 %266
        %270 = vset.pattern.permute.xlu0 0
        %271 = vperm.xlu0 %270, %v249
        %v272 = vpop.permute.xlu0 %271
        %v274 = vperm.slane %v245, 0
        %v275 = vmul.f32 %v257, %v274
        %v276 = vmul.f32 %v262, %v274
        %v277 = vmul.f32 %v267, %v274
        %v278 = vmul.f32 %v272, %v274
        %280 = vset.pattern.permute.xlu0 0
        %281 = vperm.xlu0 %280, %v250
        %v282 = vpop.permute.xlu0 %281
        %285 = vset.pattern.permute.xlu0 0
        %286 = vperm.xlu0 %285, %v251
        %v287 = vpop.permute.xlu0 %286
        %290 = vset.pattern.permute.xlu0 0
        %291 = vperm.xlu0 %290, %v252
        %v292 = vpop.permute.xlu0 %291
        %295 = vset.pattern.permute.xlu0 0
        %296 = vperm.xlu0 %295, %v253
        %v297 = vpop.permute.xlu0 %296
        %v299 = vadd.f32 %v282, %v275
        %v300 = vadd.f32 %v287, %v276
        %v301 = vadd.f32 %v292, %v277
        %v302 = vadd.f32 %v297, %v278
        %303 = vset.pattern.permute.xlu0 1
        %304 = vperm.xlu0 %303, %v246
        %v305 = vpop.permute.xlu0 %304
        %307 = vset.pattern.permute.xlu0 1
        %308 = vperm.xlu0 %307, %v247
        %v309 = vpop.permute.xlu0 %308
        %311 = vset.pattern.permute.xlu0 1
        %312 = vperm.xlu0 %311, %v248
        %v313 = vpop.permute.xlu0 %312
        %315 = vset.pattern.permute.xlu0 1
        %316 = vperm.xlu0 %315, %v249
        %v317 = vpop.permute.xlu0 %316
        %v319 = vperm.slane %v245, 1
        %v320 = vmul.f32 %v305, %v319
        %v321 = vmul.f32 %v309, %v319
        %v322 = vmul.f32 %v313, %v319
        %v323 = vmul.f32 %v317, %v319
        %v324 = vadd.f32 %v299, %v320
        %v325 = vadd.f32 %v300, %v321
        %v326 = vadd.f32 %v301, %v322
        %v327 = vadd.f32 %v302, %v323
        %328 = vset.pattern.permute.xlu0 2
        %329 = vperm.xlu0 %328, %v246
        %v330 = vpop.permute.xlu0 %329
        %332 = vset.pattern.permute.xlu0 2
        %333 = vperm.xlu0 %332, %v247
        %v334 = vpop.permute.xlu0 %333
        %336 = vset.pattern.permute.xlu0 2
        %337 = vperm.xlu0 %336, %v248
        %v338 = vpop.permute.xlu0 %337
        %340 = vset.pattern.permute.xlu0 2
        %341 = vperm.xlu0 %340, %v249
        %v342 = vpop.permute.xlu0 %341
        %v344 = vperm.slane %v245, 2
        %v345 = vmul.f32 %v330, %v344
        %v346 = vmul.f32 %v334, %v344
        %v347 = vmul.f32 %v338, %v344
        %v348 = vmul.f32 %v342, %v344
        %v349 = vadd.f32 %v324, %v345
        %v350 = vadd.f32 %v325, %v346
        %v351 = vadd.f32 %v326, %v347
        %v352 = vadd.f32 %v327, %v348
        %353 = vset.pattern.permute.xlu0 3
        %354 = vperm.xlu0 %353, %v246
        %v355 = vpop.permute.xlu0 %354
        %357 = vset.pattern.permute.xlu0 3
        %358 = vperm.xlu0 %357, %v247
        %v359 = vpop.permute.xlu0 %358
        %361 = vset.pattern.permute.xlu0 3
        %362 = vperm.xlu0 %361, %v248
        %v363 = vpop.permute.xlu0 %362
        %365 = vset.pattern.permute.xlu0 3
        %366 = vperm.xlu0 %365, %v249
        %v367 = vpop.permute.xlu0 %366
        %v369 = vperm.slane %v245, 3
        %v370 = vmul.f32 %v355, %v369
        %v371 = vmul.f32 %v359, %v369
        %v372 = vmul.f32 %v363, %v369
        %v373 = vmul.f32 %v367, %v369
        %v374 = vadd.f32 %v349, %v370
        %v375 = vadd.f32 %v350, %v371
        %v376 = vadd.f32 %v351, %v372
        %v377 = vadd.f32 %v352, %v373
        %v378 = vmax.f32 %v374, 0.0
        %v379 = vmax.f32 %v375, 0.0
        %v380 = vmax.f32 %v376, 0.0
        %v381 = vmax.f32 %v377, 0.0
        %v382 = vld [vmem:[%s3] sm:$0xff]
        %v383 = vld [vmem:[%s3 + $0x8] sm:$0xff]
        %v384 = vld [vmem:[%s3 + $0x10] sm:$0xff]
        %v385 = vld [vmem:[%s3 + $0x18] sm:$0xff]
        %v386 = vld [vmem:[%s4] sm:$0xff]
        %v387 = vld [vmem:[%s4 + $0x8] sm:$0xff]
        %v388 = vld [vmem:[%s4 + $0x10] sm:$0xff]
        %v389 = vld [vmem:[%s4 + $0x18] sm:$0xff]
        %391 = vset.pattern.permute.xlu0 0
        %392 = vperm.xlu0 %391, %v386
        %v393 = vpop.permute.xlu0 %392
        %396 = vset.pattern.permute.xlu0 0
        %397 = vperm.xlu0 %396, %v387
        %v398 = vpop.permute.xlu0 %397
        %401 = vset.pattern.permute.xlu0 0
        %402 = vperm.xlu0 %401, %v388
        %v403 = vpop.permute.xlu0 %402
        %406 = vset.pattern.permute.xlu0 0
        %407 = vperm.xlu0 %406, %v389
        %v408 = vpop.permute.xlu0 %407
        %vm410 = vcmask 261120
        %v412 = vsel %vm410, %v382, 0
        %v415 = vsel %vm410, %v383, 0
        %v418 = vsel %vm410, %v384, 0
        %v421 = vsel %vm410, %v385, 0
        %423 = vmatpush.msra.mxu0 0.0
        %424 = vmatpush.msra.mxu0 0.0
        %425 = vmatpush.msra.mxu0 0.0
        %426 = vmatpush.msra.mxu0 0.0
        %427 = vmatpush.msra.mxu0 0.0
        %428 = vmatpush.msra.mxu0 0.0
        %429 = vmatpush.msra.mxu0 0.0
        %430 = vmatpush.msra.mxu0 0.0
        %431 = vmatpush.msra.mxu0 0.0
        %432 = vmatpush.msra.mxu0 0.0
        %433 = vmatpush.msra.mxu0 0.0
        %434 = vmatpush.msra.mxu0 0.0
        %435 = vmatpush.msra.mxu0 %v381
        %436 = vmatpush.msra.mxu0 %v380
        %437 = vmatpush.msra.mxu0 %v379
        %438 = vmatpush.msra.mxu0 %v378
        %439 = vmatmul.f32.gmra.mxu0 %v412
        %v440 = vpop.f32.mrf.mxu0
        %v441 = vadd.f32 %v393, %v440
        %442 = vmatmul.f32.gmra.mxu0 %v415
        %v443 = vpop.f32.mrf.mxu0
        %v444 = vadd.f32 %v398, %v443
        %445 = vmatmul.f32.gmra.mxu0 %v418
        %v446 = vpop.f32.mrf.mxu0
        %v447 = vadd.f32 %v403, %v446
        %448 = vmatmul.f32.gmra.mxu0 %v421
        %v449 = vpop.f32.mrf.mxu0
        %v450 = vadd.f32 %v408, %v449
        %451 = vdwg.mxu0
        %v452 = vmax.f32 %v441, 0.0
        %v453 = vmax.f32 %v444, 0.0
        %v454 = vmax.f32 %v447, 0.0
        %v455 = vmax.f32 %v450, 0.0
        %v456 = vpack.c.bf16 %v452, %v452
        %v457 = vpack.c.bf16 %v453, %v453
        %v458 = vpack.c.bf16 %v454, %v454
        %v459 = vpack.c.bf16 %v455, %v455
        %vm460 = vcmask 519168
        %461 = vst.msk [vmem:[%s237] sm:$0xf] %vm460, %v456
        %462 = vst.msk [vmem:[%s237 + $0x4] sm:$0xf] %vm460, %v457
        %463 = vst.msk [vmem:[%s237 + $0x8] sm:$0xf] %vm460, %v458
        %464 = vst.msk [vmem:[%s237 + $0xc] sm:$0xf] %vm460, %v459
        %s465 = sand.u32 %s153, 1
        %s466 = scalar_lea.sflag [#allocation3], %s465
        %s467 = sand.u32 %s153, 1
        %s468 = smul.addr %s467, 16
        %s469 = scalar_lea.vmem [#allocation2], %s468
        // Predicated region
        $region41: #{tpu_custom_call.1} parent=39 // pred_check
          %p470 = pneg %p163
        $region42: #{tpu_custom_call.1} parent=39 // pred_check_branch
          %472 = sbr.rel (%p470) target = $region44
        $region43: #{tpu_custom_call.1} parent=39 // pred_region
          %474 = vsyncadd %s466, 0
          %s475 = smul.addr %s23, 4
          %s476 = sadd.s32 %s24, %s475
          %s477 = smul.addr %s476, 4
          %s478 = scalar_lea.hbm %s5, %s477
          %s479 = sshll.u32 %s469, 4
          %s480 = int_to_ptr.vmem [resolvable:$true] %s479
          %s481 = sshll.u32 %s478, 4
          %s482 = int_to_ptr.hbm [resolvable:$true] %s481
          %487 = dma.vmem_to_hbm [thread:$0]  %s480, 256, %s482, %s466, 64, 64, 4
        $region44: #{tpu_custom_call.1} parent=39 // pred_fallthru
          _
      $region40: #{tpu_custom_call.1} parent=5 // pred_fallthru
        _
      %p488 = scmp.le.s32.totalorder 2, %s14
      // Predicated region
      $region45: #{tpu_custom_call.1} parent=5 // pred_check
        %p489 = pneg %p488
      $region46: #{tpu_custom_call.1} parent=5 // pred_check_branch
        %491 = sbr.rel (%p489) target = $region48
      $region47: #{tpu_custom_call.1} parent=5 // pred_region
        %s492 = ssub.s32 %s14, 2
        // Predicated region
        $region49: #{tpu_custom_call.1} parent=47 // pred_check
          %p493 = pneg %p169
        $region50: #{tpu_custom_call.1} parent=47 // pred_check_branch
          %495 = sbr.rel (%p493) target = $region52
        $region51: #{tpu_custom_call.1} parent=47 // pred_region
          %s496 = sand.u32 %s154, 1
          %s497 = scalar_lea.sflag [#allocation3], %s496
          %s498 = sand.u32 %s154, 1
          %s499 = smul.addr %s498, 16
          %s500 = scalar_lea.vmem [#allocation2], %s499
          %502 = dma.done %s497, 256
        $region52: #{tpu_custom_call.1} parent=47 // pred_fallthru
          _
      $region48: #{tpu_custom_call.1} parent=5 // pred_fallthru
        _
    $region6: #{tpu_custom_call.1} parent=1 // loop_footer
      %s18 = sadd.s32 1, %s14
    $region7: #{tpu_custom_call.1} parent=1 // loop_footer_branch
      %13 = sbr.rel target = $region3
    $region8: #{tpu_custom_call.1} parent=1 // loop_exit
      _
    %503 = vsyncpa [#allocation3], 1
    %s504 = scalar_lea.sflag [#allocation3], 1
    %505 = vsyncpa %s504, 1

</llo_original>
